<compile_context>
chip_gen: v6e
topology: v6e:2x2x1
jax: 0.10.0
libtpu: 0.0.40
codegen_flags: <defaults>
</compile_context>

<pallas_src>
import functools

import jax
import jax.numpy as jnp
from jax import lax
from jax.experimental import pallas as pl
from jax.experimental.pallas import tpu as pltpu


_SQRT_2_OVER_PI = 0.7978845608028654
_INV_SQRT_2 = 0.7071067811865476
_GELU_COEFF = 0.044715


def _gelu(x, approximate):
    if approximate:
        # tanh-approximate GELU: the transcendental lands on the EUP slot.
        inner = _SQRT_2_OVER_PI * (x + _GELU_COEFF * (x * x * x))
        return 0.5 * x * (1.0 + jnp.tanh(inner))
    # Exact erf GELU (nn.GELU() default parity); polynomial on the VALU.
    return 0.5 * x * (1.0 + lax.erf(x * _INV_SQRT_2))


# --------------------------------------------------------------------------- #
# Fused single-pass kernel: whole (Cin/Cout, HW) slab per batch element.
# --------------------------------------------------------------------------- #
def _fused_kernel(x_ref, w_ref, g_ref, be_ref, o_ref, *, approximate):
    # x_ref: (1, Cin, HW)  w_ref: (Cout, Cin)  g_ref/be_ref: (Cout, 1)
    # o_ref: (1, Cout, HW)
    x = x_ref[0]                      # native dtype (bf16 stays bf16 for the MXU)
    w = w_ref[...]
    y = jnp.dot(w, x, preferred_element_type=jnp.float32)          # (Cout, HW) f32

    hw = y.shape[1]
    inv_hw = jnp.float32(1.0 / hw)
    s = jnp.sum(y, axis=1, keepdims=True)                          # (Cout, 1)
    q = jnp.sum(y * y, axis=1, keepdims=True)                      # (Cout, 1)
    mean = s * inv_hw
    var = jnp.maximum(q * inv_hw - mean * mean, jnp.float32(0.0))  # one-pass, clamped

    a = g_ref[...].astype(jnp.float32) * lax.rsqrt(var + jnp.float32(1e-5))
    b = be_ref[...].astype(jnp.float32) - mean * a
    y_hat = y * a + b                                              # 2 VALU ops/elem

    o_ref[0] = _gelu(y_hat, approximate).astype(o_ref.dtype)


# --------------------------------------------------------------------------- #
# Two-pass (HW-tiled) path for large spatial sizes.
# --------------------------------------------------------------------------- #
def _stats_kernel(x_ref, w_ref, sum_ref, ssq_ref):
    # x_ref: (1, Cin, hw_t)  w_ref: (Cout, Cin)
    # sum_ref / ssq_ref: (1, Cout, 1) f32, resident across the HW-tile axis.
    t = pl.program_id(1)

    @pl.when(t == 0)
    def _init():
        sum_ref[...] = jnp.zeros_like(sum_ref)
        ssq_ref[...] = jnp.zeros_like(ssq_ref)

    y = jnp.dot(w_ref[...], x_ref[0], preferred_element_type=jnp.float32)
    sum_ref[0] = sum_ref[0] + jnp.sum(y, axis=1, keepdims=True)
    ssq_ref[0] = ssq_ref[0] + jnp.sum(y * y, axis=1, keepdims=True)


def _apply_kernel(x_ref, w_ref, a_ref, b_ref, o_ref, *, approximate):
    # Recompute y = w @ x_tile (cheaper than round-tripping y through HBM since
    # Cin <= Cout and the MXU slot is otherwise idle), then normalize + GELU.
    y = jnp.dot(w_ref[...], x_ref[0], preferred_element_type=jnp.float32)
    y_hat = y * a_ref[0] + b_ref[0]
    o_ref[0] = _gelu(y_hat, approximate).astype(o_ref.dtype)


# --------------------------------------------------------------------------- #
# Wrapper
# --------------------------------------------------------------------------- #
def c_layer_forward(x_nchw, weight, bias, gamma, beta, *, approximate=True,
                    hw_tile=None, vmem_budget_bytes=40 * 1024 * 1024):
    """Forward pass of C_Layer.

    x_nchw: (B, Cin, H, W); weight: (Cout, Cin); bias/gamma/beta: (Cout,).
    approximate=True uses tanh GELU (EUP-routed); False gives exact nn.GELU() (erf).
    """
    B, Cin, H, W = x_nchw.shape
    Cout, Cin_w = weight.shape
    assert Cin_w == Cin, "weight must be (Cout, Cin) for a 1x1 conv"
    HW = H * W

    # Precondition (see header): num_groups == Cout, so the per-channel conv bias
    # is removed exactly by the GroupNorm mean subtraction.
    del bias

    # Pure reshapes only (no transposes / extra HBM round-trips).
    x = x_nchw.reshape(B, Cin, HW)
    g2 = gamma.reshape(Cout, 1)
    be2 = beta.reshape(Cout, 1)
    itemsize = jnp.dtype(x.dtype).itemsize

    def step_bytes(hw_t):
        blocks = 2 * (Cin + Cout) * hw_t * itemsize        # double-buffered x / out
        params = 2 * (Cout * Cin + 2 * Cout) * 4           # w, gamma, beta
        temps = 4 * Cout * hw_t * 4                        # y, y*y, y_hat, gelu (f32)
        return blocks + params + temps

    if hw_tile is None:
        if step_bytes(HW) <= vmem_budget_bytes or HW % 128 != 0:
            hw_tile = HW
        else:
            hw_tile = 128
            for cand in range(128, HW, 128):               # lane-aligned divisors of HW
                if HW % cand == 0 and step_bytes(cand) <= vmem_budget_bytes:
                    hw_tile = cand
    if HW % hw_tile != 0 or (hw_tile != HW and hw_tile % 128 != 0):
        raise ValueError(f"hw_tile={hw_tile} must divide HW={HW} and be a multiple of 128")

    # Explicit VMEM limit from the chosen block shapes (with headroom, capped so it
    # is valid on v7x's 64 MiB physical VMEM as well as v5e/v6e).
    vmem_limit = int(min(max(2 * step_bytes(hw_tile), 8 << 20), 64 << 20))

    if hw_tile == HW:
        # ------------------- fused single-pass path ------------------- #
        out = pl.pallas_call(
            functools.partial(_fused_kernel, approximate=approximate),
            out_shape=jax.ShapeDtypeStruct((B, Cout, HW), x.dtype),
            grid_spec=pltpu.PrefetchScalarGridSpec(
                num_scalar_prefetch=0,
                grid=(B,),
                in_specs=[
                    pl.BlockSpec((1, Cin, HW), lambda b: (b, 0, 0)),
                    pl.BlockSpec((Cout, Cin), lambda b: (0, 0)),
                    pl.BlockSpec((Cout, 1), lambda b: (0, 0)),
                    pl.BlockSpec((Cout, 1), lambda b: (0, 0)),
                ],
                out_specs=pl.BlockSpec((1, Cout, HW), lambda b: (b, 0, 0)),
            ),
            compiler_params=pltpu.CompilerParams(
                dimension_semantics=("parallel",),
                vmem_limit_bytes=vmem_limit),
        )(x, weight, g2, be2)
        return out.reshape(B, Cout, H, W)

    # ------------------- HW-tiled two-pass path ------------------- #
    nt = HW // hw_tile

    sums, ssqs = pl.pallas_call(
        _stats_kernel,
        out_shape=(jax.ShapeDtypeStruct((B, Cout, 1), jnp.float32),
                   jax.ShapeDtypeStruct((B, Cout, 1), jnp.float32)),
        grid_spec=pltpu.PrefetchScalarGridSpec(
            num_scalar_prefetch=0,
            grid=(B, nt),
            in_specs=[
                pl.BlockSpec((1, Cin, hw_tile), lambda b, t: (b, 0, t)),
                pl.BlockSpec((Cout, Cin), lambda b, t: (0, 0)),
            ],
            out_specs=(pl.BlockSpec((1, Cout, 1), lambda b, t: (b, 0, 0)),
                       pl.BlockSpec((1, Cout, 1), lambda b, t: (b, 0, 0))),
        ),
        compiler_params=pltpu.CompilerParams(
            dimension_semantics=("parallel", "arbitrary"),
            vmem_limit_bytes=vmem_limit),
    )(x, weight)

    # Fold the per-(batch, channel) stats + affine into two tiny scalars (XLA ops,
    # O(B*Cout) work between the two pallas_calls).
    inv_hw = jnp.float32(1.0 / HW)
    mean = sums * inv_hw
    var = jnp.maximum(ssqs * inv_hw - mean * mean, jnp.float32(0.0))
    a = gamma.reshape(1, Cout, 1).astype(jnp.float32) * lax.rsqrt(var + jnp.float32(1e-5))
    bvec = beta.reshape(1, Cout, 1).astype(jnp.float32) - mean * a

    out = pl.pallas_call(
        functools.partial(_apply_kernel, approximate=approximate),
        out_shape=jax.ShapeDtypeStruct((B, Cout, HW), x.dtype),
        grid_spec=pltpu.PrefetchScalarGridSpec(
            num_scalar_prefetch=0,
            grid=(B, nt),
            in_specs=[
                pl.BlockSpec((1, Cin, hw_tile), lambda b, t: (b, 0, t)),
                pl.BlockSpec((Cout, Cin), lambda b, t: (0, 0)),
                pl.BlockSpec((1, Cout, 1), lambda b, t: (b, 0, 0)),
                pl.BlockSpec((1, Cout, 1), lambda b, t: (b, 0, 0)),
            ],
            out_specs=pl.BlockSpec((1, Cout, hw_tile), lambda b, t: (b, 0, t)),
        ),
        compiler_params=pltpu.CompilerParams(
            dimension_semantics=("parallel", "parallel"),
            vmem_limit_bytes=vmem_limit),
    )(x, weight, a, bvec)

    return out.reshape(B, Cout, H, W)


# --------------------------------------------------------------------------- #
# Pure-JAX reference (includes the conv bias, demonstrating it cancels).
# --------------------------------------------------------------------------- #
def _reference(x_nchw, weight, bias, gamma, beta, approximate):
    B, Cin, H, W = x_nchw.shape
    Cout = weight.shape[0]
    x = x_nchw.reshape(B, Cin, H * W)
    y = jnp.einsum("oc,bcp->bop", weight, x) + bias[None, :, None]
    mean = jnp.mean(y, axis=2, keepdims=True)
    var = jnp.mean((y - mean) ** 2, axis=2, keepdims=True)
    yh = (y - mean) / jnp.sqrt(var + 1e-5)
    yh = yh * gamma[None, :, None] + beta[None, :, None]
    if approximate:
        out = 0.5 * yh * (1.0 + jnp.tanh(_SQRT_2_OVER_PI * (yh + _GELU_COEFF * yh ** 3)))
    else:
        out = 0.5 * yh * (1.0 + lax.erf(yh * _INV_SQRT_2))
    return out.reshape(B, Cout, H, W)


if __name__ == "__main__":
    key = jax.random.PRNGKey(0)
    k_x, k_w, k_b, k_g, k_be = jax.random.split(key, 5)

    B, Cin, Cout, H, W = 2, 4, 8, 16, 16

    x = jax.random.normal(k_x, (B, Cin, H, W), dtype=jnp.float32)

    # Deterministic parameter init (synthetic; mimics Conv2d/GroupNorm shapes).
    bound = 1.0 / (float(Cin) ** 0.5)   # fan_in of a 1x1 kernel
    conv_w = jax.random.uniform(k_w, (Cout, Cin), minval=-bound, maxval=bound,
                                dtype=jnp.float32)
    conv_b = jax.random.uniform(k_b, (Cout,), minval=-bound, maxval=bound,
                                dtype=jnp.float32)
    gn_gamma = 1.0 + 0.1 * jax.random.normal(k_g, (Cout,), dtype=jnp.float32)
    gn_beta = 0.1 * jax.random.normal(k_be, (Cout,), dtype=jnp.float32)

    ref_tanh = _reference(x, conv_w, conv_b, gn_gamma, gn_beta, approximate=True)
    ref_erf = _reference(x, conv_w, conv_b, gn_gamma, gn_beta, approximate=False)

    # 1) Fused single-pass path (default: tanh GELU on the EUP).
    out = jax.block_until_ready(c_layer_forward(x, conv_w, conv_b, gn_gamma, gn_beta))
    assert out.shape == (B, Cout, H, W)
    assert jnp.allclose(out, ref_tanh, atol=1e-4, rtol=1e-4)

    # 2) HW-tiled two-pass path (forced small tile to exercise it at demo size).
    out_tiled = jax.block_until_ready(
        c_layer_forward(x, conv_w, conv_b, gn_gamma, gn_beta, hw_tile=128))
    assert jnp.allclose(out_tiled, ref_tanh, atol=1e-4, rtol=1e-4)

    # 3) Exact-erf GELU path (bitwise-parity mode with nn.GELU() default).
    out_exact = jax.block_until_ready(
        c_layer_forward(x, conv_w, conv_b, gn_gamma, gn_beta, approximate=False))
    assert jnp.allclose(out_exact, ref_erf, atol=1e-4, rtol=1e-4)

    print("KERNEL_OK")
</pallas_src>

<mosaic_0001>
module attributes {stable_mosaic.version = 11 : i64} {
  func.func @_fused_kernel(%arg0: i32, %arg1: memref<1x4x256xf32, #tpu.memory_space<vmem>>, %arg2: memref<8x4xf32, #tpu.memory_space<vmem>>, %arg3: memref<8x1xf32, #tpu.memory_space<vmem>>, %arg4: memref<8x1xf32, #tpu.memory_space<vmem>>, %arg5: memref<1x8x256xf32, #tpu.memory_space<vmem>>) attributes {dimension_semantics = [#tpu.dimension_semantics<parallel>], iteration_bounds = array<i64: 2>, scalar_prefetch = 0 : i64, scratch_operands = 0 : i64, tpu.core_type = #tpu.core_type<tc>, window_params = [{transform_indices = @transform_0, window_bounds = array<i64: 1, 4, 256>}, {pipeline_mode = #tpu.pipeline_mode<synchronous>, transform_indices = @transform_1, window_bounds = array<i64: 8, 4>}, {pipeline_mode = #tpu.pipeline_mode<synchronous>, transform_indices = @transform_2, window_bounds = array<i64: 8, 1>}, {pipeline_mode = #tpu.pipeline_mode<synchronous>, transform_indices = @transform_3, window_bounds = array<i64: 8, 1>}, {transform_indices = @transform_4, window_bounds = array<i64: 1, 8, 256>}]} {
    %c0 = arith.constant 0 : index
    %c0_0 = arith.constant 0 : index
    %c0_1 = arith.constant 0 : index
    %0 = vector.load %arg1[%c0, %c0_0, %c0_1] : memref<1x4x256xf32, #tpu.memory_space<vmem>>, vector<1x4x256xf32>
    %1 = vector.shape_cast %0 : vector<1x4x256xf32> to vector<4x256xf32>
    %c0_2 = arith.constant 0 : index
    %c0_3 = arith.constant 0 : index
    %2 = vector.load %arg2[%c0_2, %c0_3] : memref<8x4xf32, #tpu.memory_space<vmem>>, vector<8x4xf32>
    %cst = arith.constant dense<0.000000e+00> : vector<8x256xf32>
    %3 = tpu.matmul %2, %1, %cst {dimension_numbers = #tpu.dot_dimension_numbers<[1], [0], [0], [1], [0, 0, 1, 1], [], []>} : vector<8x4xf32>, vector<4x256xf32>, vector<8x256xf32> -> vector<8x256xf32>
    %cst_4 = arith.constant dense<0.000000e+00> : vector<8xf32>
    %4 = vector.multi_reduction <add>, %3, %cst_4 [1] : vector<8x256xf32> to vector<8xf32>
    %5 = vector.shape_cast %4 : vector<8xf32> to vector<8x1xf32>
    %6 = arith.mulf %3, %3 : vector<8x256xf32>
    %cst_5 = arith.constant dense<0.000000e+00> : vector<8xf32>
    %7 = vector.multi_reduction <add>, %6, %cst_5 [1] : vector<8x256xf32> to vector<8xf32>
    %8 = vector.shape_cast %7 : vector<8xf32> to vector<8x1xf32>
    %cst_6 = arith.constant 3.906250e-03 : f32
    %9 = vector.broadcast %cst_6 : f32 to vector<8x1xf32>
    %10 = arith.mulf %5, %9 : vector<8x1xf32>
    %cst_7 = arith.constant 3.906250e-03 : f32
    %11 = vector.broadcast %cst_7 : f32 to vector<8x1xf32>
    %12 = arith.mulf %8, %11 : vector<8x1xf32>
    %13 = arith.mulf %10, %10 : vector<8x1xf32>
    %14 = arith.subf %12, %13 : vector<8x1xf32>
    %cst_8 = arith.constant 0.000000e+00 : f32
    %15 = vector.broadcast %cst_8 : f32 to vector<8x1xf32>
    %16 = arith.maximumf %14, %15 : vector<8x1xf32>
    %c0_9 = arith.constant 0 : index
    %c0_10 = arith.constant 0 : index
    %17 = vector.load %arg3[%c0_9, %c0_10] : memref<8x1xf32, #tpu.memory_space<vmem>>, vector<8x1xf32>
    %cst_11 = arith.constant 9.99999974E-6 : f32
    %18 = vector.broadcast %cst_11 : f32 to vector<8x1xf32>
    %19 = arith.addf %16, %18 : vector<8x1xf32>
    %20 = math.rsqrt %19 : vector<8x1xf32>
    %21 = arith.mulf %17, %20 : vector<8x1xf32>
    %c0_12 = arith.constant 0 : index
    %c0_13 = arith.constant 0 : index
    %22 = vector.load %arg4[%c0_12, %c0_13] : memref<8x1xf32, #tpu.memory_space<vmem>>, vector<8x1xf32>
    %23 = arith.mulf %10, %21 : vector<8x1xf32>
    %24 = arith.subf %22, %23 : vector<8x1xf32>
    %25 = vector.broadcast %21 : vector<8x1xf32> to vector<8x256xf32>
    %26 = arith.mulf %3, %25 : vector<8x256xf32>
    %27 = vector.broadcast %24 : vector<8x1xf32> to vector<8x256xf32>
    %28 = arith.addf %26, %27 : vector<8x256xf32>
    %29 = arith.mulf %28, %28 : vector<8x256xf32>
    %30 = arith.mulf %29, %28 : vector<8x256xf32>
    %cst_14 = arith.constant 4.471500e-02 : f32
    %31 = vector.broadcast %cst_14 : f32 to vector<8x256xf32>
    %32 = arith.mulf %31, %30 : vector<8x256xf32>
    %33 = arith.addf %28, %32 : vector<8x256xf32>
    %cst_15 = arith.constant 0.797884583 : f32
    %34 = vector.broadcast %cst_15 : f32 to vector<8x256xf32>
    %35 = arith.mulf %34, %33 : vector<8x256xf32>
    %cst_16 = arith.constant 5.000000e-01 : f32
    %36 = vector.broadcast %cst_16 : f32 to vector<8x256xf32>
    %37 = arith.mulf %36, %28 : vector<8x256xf32>
    %38 = math.tanh %35 : vector<8x256xf32>
    %cst_17 = arith.constant 1.000000e+00 : f32
    %39 = vector.broadcast %cst_17 : f32 to vector<8x256xf32>
    %40 = arith.addf %39, %38 : vector<8x256xf32>
    %41 = arith.mulf %37, %40 : vector<8x256xf32>
    %c0_18 = arith.constant 0 : index
    %c0_19 = arith.constant 0 : index
    %c0_20 = arith.constant 0 : index
    %42 = vector.load %arg5[%c0_18, %c0_19, %c0_20] : memref<1x8x256xf32, #tpu.memory_space<vmem>>, vector<1x8x256xf32>
    %43 = vector.shape_cast %42 : vector<1x8x256xf32> to vector<8x256xf32>
    %44 = vector.shape_cast %41 : vector<8x256xf32> to vector<1x8x256xf32>
    tpu.vector_store %arg5[%c0_18, %c0_19, %c0_20], %44 {strides = array<i32>} : memref<1x8x256xf32, #tpu.memory_space<vmem>>, vector<1x8x256xf32>,
    return
  }
  func.func @transform_0(%arg0: i32) -> (i32, i32, i32) {
    %c0_i32 = arith.constant 0 : i32
    %c0_i32_0 = arith.constant 0 : i32
    %c0_i32_1 = arith.constant 0 : i32
    return %arg0, %c0_i32, %c0_i32_0 : i32, i32, i32
  }
  func.func @transform_1(%arg0: i32) -> (i32, i32) {
    %c0_i32 = arith.constant 0 : i32
    %c0_i32_0 = arith.constant 0 : i32
    %c0_i32_1 = arith.constant 0 : i32
    return %c0_i32, %c0_i32_0 : i32, i32
  }
  func.func @transform_2(%arg0: i32) -> (i32, i32) {
    %c0_i32 = arith.constant 0 : i32
    %c0_i32_0 = arith.constant 0 : i32
    %c0_i32_1 = arith.constant 0 : i32
    return %c0_i32, %c0_i32_0 : i32, i32
  }
  func.func @transform_3(%arg0: i32) -> (i32, i32) {
    %c0_i32 = arith.constant 0 : i32
    %c0_i32_0 = arith.constant 0 : i32
    %c0_i32_1 = arith.constant 0 : i32
    return %c0_i32, %c0_i32_0 : i32, i32
  }
  func.func @transform_4(%arg0: i32) -> (i32, i32, i32) {
    %c0_i32 = arith.constant 0 : i32
    %c0_i32_0 = arith.constant 0 : i32
    %c0_i32_1 = arith.constant 0 : i32
    return %arg0, %c0_i32, %c0_i32_0 : i32, i32, i32
  }
}

</mosaic_0001>

<llo_original>
// kernel: tpu_custom_call.1
$region0: #{tpu_custom_call.1}
  #allocation0 [shape = 'u32[]', space=smem, size = 0x4, offset = 0x4, fixed_abs, tag = 'smem constant byte address 0x4 - core index']
  #allocation1 [shape = 'u32[144,128]{1,0:T(1,128)}', space=vmem, size = 0x12000, scoped, tag = 'internal scratch']
  %s0 = inlined_call_operand.vmem [shape: f32[2,4,256], index: 0, kind: input, shape index: {}]
  %s1 = inlined_call_operand.vmem [shape: f32[8,4], index: 1, kind: input, shape index: {}]
  %s2 = inlined_call_operand.vmem [shape: f32[8,1], index: 2, kind: input, shape index: {}]
  %s3 = inlined_call_operand.vmem [shape: f32[8,1], index: 3, kind: input, shape index: {}]
  %s4 = inlined_call_operand.hbm [shape: f32[2,8,256], index: 4, kind: output, shape index: {}]
  %s5 = sld [smem:[#allocation0]]
  $region49: #{tpu_custom_call.1} parent=0
    _
  %s7 = ssub.s32 1, %s5
  %s8 = scalar_select 0, %s7, %s5
  $region1: #{tpu_custom_call.1} parent=0
    #allocation2 [shape = 'u8[16384]{0}', space=vmem, size = 0x4000, scoped, tag = 'output window, operand 0']
    #allocation3 [shape = 's32[2]{0}', space=sflag, size = 0x8, scoped, tag = 'scoped memory for tpu_custom_call.1']
    %9 = vsyncpa [#allocation3], 0
    %s10 = scalar_lea.sflag [#allocation3], 1
    %11 = vsyncpa %s10, 0
    loop: start=0, step=1, limit=4
    $region2: #{tpu_custom_call.1} parent=1 // loop_pre_header
      _
    $region3: #{tpu_custom_call.1} parent=1 // loop_header
      %s13 = sphi 0, %s17
      %p14 = scmp.ge.s32.totalorder %s13, 4
      %s23 = sphi 0, %s25
      %s26 = sphi 0, %s23
      %s27 = sphi 0, %s26
      %s43 = sphi 0, %s27
      %s47 = sphi 0, %s47
      %s49 = sphi 0, %s47
      %s50 = sphi 0, %s49
      %s64 = sphi 0, %s50
      %s68 = sphi 0, %s68
      %s70 = sphi 0, %s68
      %s71 = sphi 0, %s70
      %s85 = sphi 0, %s71
      %s89 = sphi 0, %s89
      %s91 = sphi 0, %s89
      %s92 = sphi 0, %s91
      %s106 = sphi 0, %s92
      %s112 = sphi 0, %s114
      %s115 = sphi 0, %s112
      %s116 = sphi 0, %s115
      %s132 = sphi 0, %s116
    $region4: #{tpu_custom_call.1} parent=1 // loop_header_branch
      %16 = sbr.rel (%p14) target = $region8
    $region5: #{tpu_custom_call.1} parent=1 // loop_body
      %s18 = ssub.s32 %s13, 1
      %s19 = ssub.s32 %s13, 2
      %s20 = sadd.s32 %s13, 1
      %s21 = ssub.s32 %s13, %s20
      %p22 = scmp.eq.s32.totalorder %s21, 0
      %s24 = sadd.s32 %s23, 1
      %s25 = scalar_select %p22, %s23, %s24
      %p28 = pneg %p22
      %p29 = scmp.eq.s32.totalorder %s13, 1
      %p30 = por %p28, %p29
      %p31 = scmp.ne.s32.totalorder %s23, %s26
      %p32 = scmp.eq.s32.totalorder %s13, 0
      %p33 = por %p31, %p32
      %p34 = scmp.ne.s32.totalorder %s23, %s26
      %p35 = scmp.eq.s32.totalorder %s18, 1
      %p36 = por %p34, %p35
      %p37 = scmp.ne.s32.totalorder %s26, %s27
      %p38 = scmp.eq.s32.totalorder %s18, 0
      %p39 = por %p37, %p38
      %p40 = scmp.ne.s32.totalorder %s26, %s27
      %p41 = scmp.eq.s32.totalorder %s19, 1
      %p42 = por %p40, %p41
      %p44 = scmp.ne.s32.totalorder %s27, %s43
      %p45 = scmp.eq.s32.totalorder %s19, 0
      %p46 = por %p44, %p45
      %s48 = sadd.s32 %s47, 1
      %p51 = scmp.eq.s32.totalorder %s13, 1
      %p52 = scmp.ne.s32.totalorder %s47, %s49
      %p53 = scmp.eq.s32.totalorder %s13, 0
      %p54 = por %p52, %p53
      %p55 = scmp.ne.s32.totalorder %s47, %s49
      %p56 = scmp.eq.s32.totalorder %s18, 1
      %p57 = por %p55, %p56
      %p58 = scmp.ne.s32.totalorder %s49, %s50
      %p59 = scmp.eq.s32.totalorder %s18, 0
      %p60 = por %p58, %p59
      %p61 = scmp.ne.s32.totalorder %s49, %s50
      %p62 = scmp.eq.s32.totalorder %s19, 1
      %p63 = por %p61, %p62
      %p65 = scmp.ne.s32.totalorder %s50, %s64
      %p66 = scmp.eq.s32.totalorder %s19, 0
      %p67 = por %p65, %p66
      %s69 = sadd.s32 %s68, 1
      %p72 = scmp.eq.s32.totalorder %s13, 1
      %p73 = scmp.ne.s32.totalorder %s68, %s70
      %p74 = scmp.eq.s32.totalorder %s13, 0
      %p75 = por %p73, %p74
      %p76 = scmp.ne.s32.totalorder %s68, %s70
      %p77 = scmp.eq.s32.totalorder %s18, 1
      %p78 = por %p76, %p77
      %p79 = scmp.ne.s32.totalorder %s70, %s71
      %p80 = scmp.eq.s32.totalorder %s18, 0
      %p81 = por %p79, %p80
      %p82 = scmp.ne.s32.totalorder %s70, %s71
      %p83 = scmp.eq.s32.totalorder %s19, 1
      %p84 = por %p82, %p83
      %p86 = scmp.ne.s32.totalorder %s71, %s85
      %p87 = scmp.eq.s32.totalorder %s19, 0
      %p88 = por %p86, %p87
      %s90 = sadd.s32 %s89, 1
      %p93 = scmp.eq.s32.totalorder %s13, 1
      %p94 = scmp.ne.s32.totalorder %s89, %s91
      %p95 = scmp.eq.s32.totalorder %s13, 0
      %p96 = por %p94, %p95
      %p97 = scmp.ne.s32.totalorder %s89, %s91
      %p98 = scmp.eq.s32.totalorder %s18, 1
      %p99 = por %p97, %p98
      %p100 = scmp.ne.s32.totalorder %s91, %s92
      %p101 = scmp.eq.s32.totalorder %s18, 0
      %p102 = por %p100, %p101
      %p103 = scmp.ne.s32.totalorder %s91, %s92
      %p104 = scmp.eq.s32.totalorder %s19, 1
      %p105 = por %p103, %p104
      %p107 = scmp.ne.s32.totalorder %s92, %s106
      %p108 = scmp.eq.s32.totalorder %s19, 0
      %p109 = por %p107, %p108
      %s110 = ssub.s32 %s13, %s20
      %p111 = scmp.eq.s32.totalorder %s110, 0
      %s113 = sadd.s32 %s112, 1
      %s114 = scalar_select %p111, %s112, %s113
      %p117 = pneg %p111
      %p118 = scmp.eq.s32.totalorder %s13, 1
      %p119 = por %p117, %p118
      %p120 = scmp.ne.s32.totalorder %s112, %s115
      %p121 = scmp.eq.s32.totalorder %s13, 0
      %p122 = por %p120, %p121
      %p123 = scmp.ne.s32.totalorder %s112, %s115
      %p124 = scmp.eq.s32.totalorder %s18, 1
      %p125 = por %p123, %p124
      %p126 = scmp.ne.s32.totalorder %s115, %s116
      %p127 = scmp.eq.s32.totalorder %s18, 0
      %p128 = por %p126, %p127
      %p129 = scmp.ne.s32.totalorder %s115, %s116
      %p130 = scmp.eq.s32.totalorder %s19, 1
      %p131 = por %p129, %p130
      %p133 = scmp.ne.s32.totalorder %s116, %s132
      %p134 = scmp.eq.s32.totalorder %s19, 0
      %p135 = por %p133, %p134
      %p136 = scmp.le.s32.totalorder 1, %s13
      %p137 = scmp.lt.s32.totalorder %s13, 3
      %p138 = pnand %p136, %p137
      %p139 = pneg %p138
      // Predicated region
      $region9: #{tpu_custom_call.1} parent=5 // pred_check
        _
      $region10: #{tpu_custom_call.1} parent=5 // pred_check_branch
        %141 = sbr.rel (%p138) target = $region12
      $region11: #{tpu_custom_call.1} parent=5 // pred_region
        %s142 = ssub.s32 %s13, 1
        // Predicated region
        $region13: #{tpu_custom_call.1} parent=11 // pred_check
          %p143 = pneg %p60
        $region14: #{tpu_custom_call.1} parent=11 // pred_check_branch
          %145 = sbr.rel (%p143) target = $region16
        $region15: #{tpu_custom_call.1} parent=11 // pred_region
          _
        $region16: #{tpu_custom_call.1} parent=11 // pred_fallthru
          _
        // Predicated region
        $region17: #{tpu_custom_call.1} parent=11 // pred_check
          %p146 = pneg %p81
        $region18: #{tpu_custom_call.1} parent=11 // pred_check_branch
          %148 = sbr.rel (%p146) target = $region20
        $region19: #{tpu_custom_call.1} parent=11 // pred_region
          _
        $region20: #{tpu_custom_call.1} parent=11 // pred_fallthru
          _
        // Predicated region
        $region21: #{tpu_custom_call.1} parent=11 // pred_check
          %p149 = pneg %p102
        $region22: #{tpu_custom_call.1} parent=11 // pred_check_branch
          %151 = sbr.rel (%p149) target = $region24
        $region23: #{tpu_custom_call.1} parent=11 // pred_region
          _
        $region24: #{tpu_custom_call.1} parent=11 // pred_fallthru
          _
      $region12: #{tpu_custom_call.1} parent=5 // pred_fallthru
        _
      %p152 = scmp.lt.s32.totalorder %s13, 2
      // Predicated region
      $region25: #{tpu_custom_call.1} parent=5 // pred_check
        %p153 = pneg %p152
      $region26: #{tpu_custom_call.1} parent=5 // pred_check_branch
        %155 = sbr.rel (%p153) target = $region28
      $region27: #{tpu_custom_call.1} parent=5 // pred_region
        // Predicated region
        $region29: #{tpu_custom_call.1} parent=27 // pred_check
          %p156 = pneg %p33
        $region30: #{tpu_custom_call.1} parent=27 // pred_check_branch
          %158 = sbr.rel (%p156) target = $region32
        $region31: #{tpu_custom_call.1} parent=27 // pred_region
          %p159 = scmp.lt.s32.totalorder %s13, 1
          %s160 = scalar_select %p159, %s13, 1
          %s161 = smul.addr %s160, 2
          %s162 = smul.addr %s161, 4
          %s163 = scalar_lea.vmem %s0, %s162
        $region32: #{tpu_custom_call.1} parent=27 // pred_fallthru
          _
      $region28: #{tpu_custom_call.1} parent=5 // pred_fallthru
        _
      %p164 = scmp.le.s32.totalorder 1, %s13
      %p165 = scmp.lt.s32.totalorder %s13, 3
      %p166 = pnand %p164, %p165
      %p167 = pneg %p166
      // Predicated region
      $region33: #{tpu_custom_call.1} parent=5 // pred_check
        _
      $region34: #{tpu_custom_call.1} parent=5 // pred_check_branch
        %169 = sbr.rel (%p166) target = $region36
      $region35: #{tpu_custom_call.1} parent=5 // pred_region
        %s170 = ssub.s32 %s13, 1
        %p171 = scmp.lt.s32.totalorder %s18, 1
        %s172 = scalar_select %p171, %s18, 1
        %s173 = smul.addr %s172, 2
        %s174 = smul.addr %s173, 4
        %s175 = scalar_lea.vmem %s0, %s174
        %p176 = pneg %p39
        %p177 = pneg %p36
        %p178 = pneg %p60
        %p179 = pneg %p57
        %p180 = pneg %p81
        %p181 = pneg %p78
        %p182 = pneg %p102
        %p183 = pneg %p99
        %p184 = pneg %p128
        %p185 = pneg %p125
        %s186 = sand.u32 %s115, 1
        %s187 = scalar_lea.sflag [#allocation3], %s186
        %s188 = sand.u32 %s115, 1
        %s189 = smul.addr %s188, 16
        %s190 = scalar_lea.vmem [#allocation2], %s189
        %p191 = scmp.lt.s32.totalorder %s18, 1
        %s192 = scalar_select %p191, %s18, 1
        %s193 = smul.addr %s192, 2
        %s194 = smul.addr %s193, 4
        %s195 = scalar_lea.vmem %s0, %s194
        %v196 = vld [vmem:[%s195] sm:$0xff]
        %v197 = vld [vmem:[%s1] sm:$0xff]
        %v199 = vcombine.high %v196, %v196
        %vm200 = vcmask 31744
        %v202 = vsel %vm200, %v197, 0
        %vm204 = vcmask 1043456
        %v205 = vsel %vm204, %v196, 0
        %v207 = vsel %vm204, %v199, 0
        %209 = vmatprep.subr.mxu0 0.0
        %210 = vmatpush1.msra.mxu0 0.0
        %211 = vmatprep.subr.mxu0 0.0
        %212 = vmatpush1.msra.mxu0 0.0
        %213 = vmatprep.subr.mxu0 0.0
        %214 = vmatpush1.msra.mxu0 0.0
        %215 = vmatprep.subr.mxu0 0.0
        %216 = vmatpush1.msra.mxu0 0.0
        %217 = vmatprep.subr.mxu0 0.0
        %218 = vmatpush1.msra.mxu0 0.0
        %219 = vmatprep.subr.mxu0 0.0
        %220 = vmatpush1.msra.mxu0 0.0
        %221 = vmatprep.subr.mxu0 0.0
        %222 = vmatpush1.msra.mxu0 0.0
        %223 = vmatprep.subr.mxu0 0.0
        %224 = vmatpush1.msra.mxu0 0.0
        %225 = vmatprep.subr.mxu0 0.0
        %226 = vmatpush1.msra.mxu0 0.0
        %227 = vmatprep.subr.mxu0 0.0
        %228 = vmatpush1.msra.mxu0 0.0
        %229 = vmatprep.subr.mxu0 0.0
        %230 = vmatpush1.msra.mxu0 0.0
        %231 = vmatprep.subr.mxu0 0.0
        %232 = vmatpush1.msra.mxu0 0.0
        %233 = vmatprep.subr.mxu0 0.0
        %234 = vmatpush1.msra.mxu0 0.0
        %235 = vmatprep.subr.mxu0 0.0
        %236 = vmatpush1.msra.mxu0 0.0
        %237 = vmatprep.subr.mxu0 0.0
        %238 = vmatpush1.msra.mxu0 0.0
        %239 = vmatprep.subr.mxu0 %v207
        %240 = vmatpush1.msra.mxu0 %v205
        %241 = vmatprep.subr.mxu0 0.0
        %242 = vmatpush2.msra.mxu0 0.0
        %243 = vmatprep.subr.mxu0 0.0
        %244 = vmatpush2.msra.mxu0 0.0
        %245 = vmatprep.subr.mxu0 0.0
        %246 = vmatpush2.msra.mxu0 0.0
        %247 = vmatprep.subr.mxu0 0.0
        %248 = vmatpush2.msra.mxu0 0.0
        %249 = vmatprep.subr.mxu0 0.0
        %250 = vmatpush2.msra.mxu0 0.0
        %251 = vmatprep.subr.mxu0 0.0
        %252 = vmatpush2.msra.mxu0 0.0
        %253 = vmatprep.subr.mxu0 0.0
        %254 = vmatpush2.msra.mxu0 0.0
        %255 = vmatprep.subr.mxu0 0.0
        %256 = vmatpush2.msra.mxu0 0.0
        %257 = vmatprep.subr.mxu0 0.0
        %258 = vmatpush2.msra.mxu0 0.0
        %259 = vmatprep.subr.mxu0 0.0
        %260 = vmatpush2.msra.mxu0 0.0
        %261 = vmatprep.subr.mxu0 0.0
        %262 = vmatpush2.msra.mxu0 0.0
        %263 = vmatprep.subr.mxu0 0.0
        %264 = vmatpush2.msra.mxu0 0.0
        %265 = vmatprep.subr.mxu0 0.0
        %266 = vmatpush2.msra.mxu0 0.0
        %267 = vmatprep.subr.mxu0 0.0
        %268 = vmatpush2.msra.mxu0 0.0
        %269 = vmatprep.subr.mxu0 0.0
        %270 = vmatpush2.msra.mxu0 0.0
        %271 = vmatprep.subr.mxu0 0.0
        %272 = vmatpush2.msra.mxu0 0.0
        %273 = vmatprep.mubr.f32.mxu0 0.0
        %274 = vmatmul.mubr.f32.gmra.mxu0 %v202
        %v275 = vpop.f32.mrf.mxu0
        %v276 = vadd.f32 0.0, %v275
        %v277 = vpop.f32.mrf.mxu0
        %v278 = vadd.f32 0.0, %v277
        %279 = vdwg.mxu0
        %v280 = vadd.f32 %v276, %v278
        %281 = vadd.xlane.f32.xlu0 %v280
        %v282 = vpop.xlane.xlu0 %281
        %v283 = vmul.f32 %v276, %v276
        %v284 = vmul.f32 %v278, %v278
        %v285 = vadd.f32 %v283, %v284
        %286 = vadd.xlane.f32.xlu0 %v285
        %v287 = vpop.xlane.xlu0 %286
        %v288 = vmul.f32 %v282, 0.00390625
        %v289 = vmul.f32 %v287, 0.00390625
        %v290 = vmul.f32 %v288, %v288
        %v291 = vsub.f32 %v289, %v290
        %v292 = vmax.f32 %v291, 0.0
        %v293 = vld [vmem:[%s2] sm:$0xff]
        %v294 = vadd.f32 %v292, 1e-05
        %v295 = vrsqrt.pop %v294
        %v296 = vmul.f32 %v293, %v295
        %v297 = vld [vmem:[%s3] sm:$0xff]
        %v298 = vmul.f32 %v288, %v296
        %v299 = vsub.f32 %v297, %v298
        %301 = vset.pattern.permute.xlu0 0
        %302 = vperm.xlu0 %301, %v296
        %v303 = vpop.permute.xlu0 %302
        %v305 = vmul.f32 %v276, %v303
        %v306 = vmul.f32 %v278, %v303
        %308 = vset.pattern.permute.xlu0 0
        %309 = vperm.xlu0 %308, %v299
        %v310 = vpop.permute.xlu0 %309
        %v312 = vadd.f32 %v305, %v310
        %v313 = vadd.f32 %v306, %v310
        %v314 = vmul.f32 %v312, %v312
        %v315 = vmul.f32 %v313, %v313
        %v316 = vmul.f32 %v314, %v312
        %v317 = vmul.f32 %v315, %v313
        %v318 = vmul.f32 %v316, 0.044715
        %v319 = vmul.f32 %v317, 0.044715
        %v320 = vadd.f32 %v312, %v318
        %v321 = vadd.f32 %v313, %v319
        %v322 = vmul.f32 %v320, 0.7978846
        %v323 = vmul.f32 %v321, 0.7978846
        %v324 = vmul.f32 %v312, 0.5
        %v325 = vmul.f32 %v313, 0.5
        %v326 = vtanh.pop %v322
        %v327 = vtanh.pop %v323
        %v328 = vadd.f32 %v326, 1.0
        %v329 = vadd.f32 %v327, 1.0
        %v330 = vmul.f32 %v324, %v328
        %v331 = vmul.f32 %v325, %v329
        %332 = vst [vmem:[%s190] sm:$0xff] %v330
        %333 = vst [vmem:[%s190 + $0x8] sm:$0xff] %v331
        %s334 = sand.u32 %s115, 1
        %s335 = scalar_lea.sflag [#allocation3], %s334
        %s336 = sand.u32 %s115, 1
        %s337 = smul.addr %s336, 16
        %s338 = scalar_lea.vmem [#allocation2], %s337
        // Predicated region
        $region37: #{tpu_custom_call.1} parent=35 // pred_check
          %p339 = pneg %p125
        $region38: #{tpu_custom_call.1} parent=35 // pred_check_branch
          %341 = sbr.rel (%p339) target = $region40
        $region39: #{tpu_custom_call.1} parent=35 // pred_region
          %s343 = ssub.s32 256, 256
          %344 = vsyncadd %s335, %s343
          %s345 = smul.addr %s18, 2
          %s346 = smul.addr %s345, 128
          %s347 = scalar_lea.hbm %s4, %s346
          %s349 = sshll.u32 %s338, 4
          %s350 = int_to_ptr.vmem [resolvable:$true] %s349
          %352 = dma.vmem_to_hbm [thread:$0]  %s350, 256, %s347, %s335
        $region40: #{tpu_custom_call.1} parent=35 // pred_fallthru
          _
      $region36: #{tpu_custom_call.1} parent=5 // pred_fallthru
        _
      %p353 = scmp.le.s32.totalorder 2, %s13
      // Predicated region
      $region41: #{tpu_custom_call.1} parent=5 // pred_check
        %p354 = pneg %p353
      $region42: #{tpu_custom_call.1} parent=5 // pred_check_branch
        %356 = sbr.rel (%p354) target = $region44
      $region43: #{tpu_custom_call.1} parent=5 // pred_region
        %s357 = ssub.s32 %s13, 2
        // Predicated region
        $region45: #{tpu_custom_call.1} parent=43 // pred_check
          %p358 = pneg %p131
        $region46: #{tpu_custom_call.1} parent=43 // pred_check_branch
          %360 = sbr.rel (%p358) target = $region48
        $region47: #{tpu_custom_call.1} parent=43 // pred_region
          %s361 = sand.u32 %s116, 1
          %s362 = scalar_lea.sflag [#allocation3], %s361
          %s363 = sand.u32 %s116, 1
          %s364 = smul.addr %s363, 16
          %s365 = scalar_lea.vmem [#allocation2], %s364
          %366 = dma.done %s362, 256
        $region48: #{tpu_custom_call.1} parent=43 // pred_fallthru
          _
      $region44: #{tpu_custom_call.1} parent=5 // pred_fallthru
        _
    $region6: #{tpu_custom_call.1} parent=1 // loop_footer
      %s17 = sadd.s32 1, %s13
    $region7: #{tpu_custom_call.1} parent=1 // loop_footer_branch
      %12 = sbr.rel target = $region3
    $region8: #{tpu_custom_call.1} parent=1 // loop_exit
      _
    %367 = vsyncpa [#allocation3], 1
    %s368 = scalar_lea.sflag [#allocation3], 1
    %369 = vsyncpa %s368, 1

</llo_original>
